<compile_context>
chip_gen: v6e
topology: v6e:2x2x1
jax: 0.10.0
libtpu: 0.0.40
codegen_flags: <defaults>
</compile_context>

<pallas_src>
import jax
import jax.numpy as jnp
import numpy as np
from jax.experimental import pallas as pl
from jax.experimental.pallas import tpu as pltpu

NUM_EXPERTS = 4        # E = K - 1 "real" experts (dummy expert index 0 is sliced away)
NUM_CLASSES = 10
_EXPERT_STRIDE = 32    # lanes per expert in the fused head (32-lane aligned blocks)
_N_FUSED = NUM_EXPERTS * _EXPERT_STRIDE        # 128 = exactly one lane group (no extra pad)
_TB_MAX = 512                                   # max batch-tile rows per grid step
_X_VMEM_BUDGET = 24 * 1024 * 1024               # budget for the double-buffered x stream

assert _N_FUSED == 128 and NUM_CLASSES + 1 <= _EXPERT_STRIDE


def _round_up(a, m):
    return (a + m - 1) // m * m


def ndpm_forward_kernel(x_ref, w_ref, b_ref, logp_ref, out_ref):
    E, C, S = NUM_EXPERTS, NUM_CLASSES, _EXPERT_STRIDE

    # x streamed in its native dtype (f32); bf16 cast happens here on the VPU
    # (free slot) right before the MXU pass — no separate wrapper cast pass.
    x = x_ref[...].astype(jnp.bfloat16)                                # (TB, D)

    # Single fused MXU pass. Expert e owns lanes [S*e, S*(e+1)):
    #   lanes [0, C): class logits (d head), lane C: g head (nll proxy, pre-relu),
    #   lanes (C, S): unused (zero weight/bias), masked below.
    fused = jnp.dot(x, w_ref[...], preferred_element_type=jnp.float32) + b_ref[...]

    lane = jax.lax.broadcasted_iota(jnp.int32, (1, S), 1)
    cls_mask = lane < C                                                # (1, S)
    neg_big = jnp.float32(-1e30)

    terms = []
    for e in range(E):
        blk = fused[:, S * e:S * (e + 1)]                              # (TB, S) aligned slice
        nll_e = jnp.maximum(blk[:, C:C + 1], 0.0)                      # (TB, 1) non-neg NLL
        le = jnp.where(cls_mask, blk, neg_big)                         # mask non-class lanes
        m_e = jnp.max(le, axis=-1, keepdims=True)
        lse_e = m_e + jnp.log(jnp.sum(jnp.exp(le - m_e), axis=-1, keepdims=True))
        # log_prior[e] (SMEM scalar) + log_evid[:, e] + log_softmax(logits_e)
        terms.append((logp_ref[0, e] - nll_e) + (le - lse_e))          # (TB, S)

    # Mixture logsumexp over experts (per class lane).
    m = terms[0]
    for t in terms[1:]:
        m = jnp.maximum(m, t)
    s = jnp.zeros_like(m)
    for t in terms:
        s = s + jnp.exp(t - m)
    # (TB, S) slab: classes in lanes [0, C); pad lanes hold finite junk, sliced off outside.
    out_ref[...] = m + jnp.log(s)


def pack_ndpm_params(wg, bg, wd, bd, counts):
    """One-time parameter packing (not on the per-batch hot path)."""
    E, C, S = NUM_EXPERTS, NUM_CLASSES, _EXPERT_STRIDE
    D = wg.shape[0]
    w = jnp.zeros((D, E * S), jnp.float32)
    b = jnp.zeros((1, E * S), jnp.float32)
    for e in range(E):
        w = w.at[:, e * S:e * S + C].set(wd[:, e * C:(e + 1) * C].astype(jnp.float32))
        w = w.at[:, e * S + C].set(wg[:, e].astype(jnp.float32))
        b = b.at[:, e * S:e * S + C].set(bd[:, e * C:(e + 1) * C].astype(jnp.float32))
        b = b.at[:, e * S + C].set(bg[0, e].astype(jnp.float32))
    # Normalized log prior (clamp guards counts == 0; all-zero counts degenerate to uniform-ish).
    logc = jnp.log(jnp.maximum(counts.astype(jnp.float32), 1e-30))
    log_prior = logc - jax.scipy.special.logsumexp(logc, axis=-1, keepdims=True)
    return w.astype(jnp.bfloat16), b, log_prior


def _pick_batch_tile(B, D, itemsize):
    if B < 16:
        return B                                   # single exact block (rows == full array dim)
    # >= 2 grid steps so both v7x TensorCores get work; cap at _TB_MAX (amortize
    # the ~0.35us/step overhead on v5e/v6e with large tiles).
    tb = min(_TB_MAX, _round_up(pl.cdiv(B, 2), 8))
    # Keep the double-buffered x stream inside the VMEM budget for any D.
    max_rows = max(8, (_X_VMEM_BUDGET // (2 * D * itemsize)) // 8 * 8)
    return min(tb, max_rows)


def ndpm_forward(x_nchw, w_fused, b_fused, log_prior):
    E, C, S = NUM_EXPERTS, NUM_CLASSES, _EXPERT_STRIDE
    B = x_nchw.shape[0]
    D = int(np.prod(x_nchw.shape[1:]))
    x2d = x_nchw.reshape(B, D)                     # free metadata reshape; dtype untouched

    tb = _pick_batch_tile(B, D, x2d.dtype.itemsize)
    grid = (pl.cdiv(B, tb),)

    cost = pl.CostEstimate(
        flops=2 * B * D * (E * S),
        bytes_accessed=B * D * x2d.dtype.itemsize + D * (E * S) * 2
        + (E * S) * 4 + E * 4 + B * S * 4,
        transcendentals=B * (E * (S + 1) + S + 1),
    )

    out = pl.pallas_call(
        ndpm_forward_kernel,
        out_shape=jax.ShapeDtypeStruct((B, S), jnp.float32),
        grid=grid,
        in_specs=[
            pl.BlockSpec((tb, D), lambda i: (i, 0)),             # x: streamed, double-buffered
            pl.BlockSpec(memory_space=pltpu.MemorySpace.VMEM),   # fused weight: whole-array, single VMEM copy
            pl.BlockSpec(memory_space=pltpu.MemorySpace.VMEM),   # fused bias:   whole-array VMEM
            pl.BlockSpec(memory_space=pltpu.MemorySpace.SMEM),   # log prior:    SMEM scalars
        ],
        out_specs=pl.BlockSpec((tb, S), lambda i: (i, 0)),
        compiler_params=pltpu.CompilerParams(
            dimension_semantics=("parallel",),                   # v7x: shard batch tiles across TCs
            vmem_limit_bytes=32 * 1024 * 1024,                   # safe on v5e/v6e/v7x
        ),
        cost_estimate=cost,
    )(x2d, w_fused, b_fused, log_prior)
    return out[:, :C]                                            # classes live in lanes [0, C)


def ndpm_forward_ref(x_nchw, wg, bg, wd, bd, counts, compute_dtype=jnp.bfloat16):
    """Pure-JAX reference mirroring Ndpm.forward with the same synthetic experts.
    compute_dtype=bf16 matches the kernel precision; f32 gives a true-f32 check."""
    E, C = NUM_EXPERTS, NUM_CLASSES
    B = x_nchw.shape[0]
    x = x_nchw.reshape(B, -1).astype(compute_dtype)
    nll = jnp.maximum(
        jnp.dot(x, wg.astype(compute_dtype), preferred_element_type=jnp.float32) + bg, 0.0)
    log_evid = (-nll)[:, :, None]                                # (B, E, 1)
    logc = jnp.log(jnp.maximum(counts.astype(jnp.float32), 1e-30))
    log_prior = (logc - jax.scipy.special.logsumexp(logc, axis=-1, keepdims=True))[:, :, None]
    logits = (jnp.dot(x, wd.astype(compute_dtype), preferred_element_type=jnp.float32)
              + bd).reshape(B, E, C)
    log_pred = jax.nn.log_softmax(logits, axis=-1)               # (B, E, C)
    return jax.scipy.special.logsumexp(log_prior + log_evid + log_pred, axis=1)


if __name__ == "__main__":
    key = jax.random.PRNGKey(0)
    kx, kwg, kbg, kwd, kbd, kc = jax.random.split(key, 6)

    B, Cin, H, W = 2, 4, 16, 16
    D = Cin * H * W

    x = jax.random.normal(kx, (B, Cin, H, W), jnp.float32)
    wg = 0.05 * jax.random.normal(kwg, (D, NUM_EXPERTS), jnp.float32)
    bg = 0.05 * jax.random.normal(kbg, (1, NUM_EXPERTS), jnp.float32)
    wd = 0.05 * jax.random.normal(kwd, (D, NUM_EXPERTS * NUM_CLASSES), jnp.float32)
    bd = 0.05 * jax.random.normal(kbd, (1, NUM_EXPERTS * NUM_CLASSES), jnp.float32)
    counts = jax.random.uniform(kc, (1, NUM_EXPERTS), jnp.float32, 1.0, 10.0)

    w_fused, b_fused, log_prior = pack_ndpm_params(wg, bg, wd, bd, counts)
    out = jax.block_until_ready(ndpm_forward(x, w_fused, b_fused, log_prior))

    assert out.shape == (B, NUM_CLASSES), out.shape
    # Tight check vs. an identical-precision (bf16-input / f32-accumulate) reference.
    ref_bf16 = ndpm_forward_ref(x, wg, bg, wd, bd, counts, jnp.bfloat16)
    np.testing.assert_allclose(np.asarray(out), np.asarray(ref_bf16), rtol=2e-3, atol=2e-3)
    # Looser sanity check vs. the true-f32 math (bounds bf16 drift of the fast path).
    ref_f32 = ndpm_forward_ref(x, wg, bg, wd, bd, counts, jnp.float32)
    np.testing.assert_allclose(np.asarray(out), np.asarray(ref_f32), rtol=5e-2, atol=5e-2)
    print("KERNEL_OK")
</pallas_src>

<mosaic_0001>
module attributes {stable_mosaic.version = 11 : i64} {
  func.func @ndpm_forward_kernel(%arg0: i32, %arg1: memref<2x1024xf32, #tpu.memory_space<vmem>>, %arg2: memref<1024x128xbf16, #tpu.memory_space<vmem>>, %arg3: memref<1x128xf32, #tpu.memory_space<vmem>>, %arg4: memref<1x4xf32, #tpu.memory_space<smem>>, %arg5: memref<2x32xf32, #tpu.memory_space<vmem>>) attributes {dimension_semantics = [#tpu.dimension_semantics<parallel>], iteration_bounds = array<i64: 1>, scalar_prefetch = 0 : i64, scratch_operands = 0 : i64, tpu.core_type = #tpu.core_type<tc>, window_params = [{transform_indices = @transform_0, window_bounds = array<i64: 2, 1024>}, {pipeline_mode = #tpu.pipeline_mode<synchronous>, transform_indices = @transform_1, window_bounds = array<i64: 1024, 128>}, {pipeline_mode = #tpu.pipeline_mode<synchronous>, transform_indices = @transform_2, window_bounds = array<i64: 1, 128>}, {transform_indices = @transform_3, window_bounds = array<i64: 1, 4>}, {transform_indices = @transform_4, window_bounds = array<i64: 2, 32>}]} {
    %c0 = arith.constant 0 : index
    %c0_0 = arith.constant 0 : index
    %0 = vector.load %arg1[%c0, %c0_0] : memref<2x1024xf32, #tpu.memory_space<vmem>>, vector<2x1024xf32>
    %1 = arith.truncf %0 : vector<2x1024xf32> to vector<2x1024xbf16>
    %c0_1 = arith.constant 0 : index
    %c0_2 = arith.constant 0 : index
    %2 = vector.load %arg2[%c0_1, %c0_2] : memref<1024x128xbf16, #tpu.memory_space<vmem>>, vector<1024x128xbf16>
    %cst = arith.constant dense<0.000000e+00> : vector<2x128xf32>
    %3 = tpu.matmul %1, %2, %cst {dimension_numbers = #tpu.dot_dimension_numbers<[1], [0], [0], [1], [0, 0, 1, 1], [], []>} : vector<2x1024xbf16>, vector<1024x128xbf16>, vector<2x128xf32> -> vector<2x128xf32>
    %c0_3 = arith.constant 0 : index
    %c0_4 = arith.constant 0 : index
    %4 = vector.load %arg3[%c0_3, %c0_4] : memref<1x128xf32, #tpu.memory_space<vmem>>, vector<1x128xf32>
    %5 = vector.broadcast %4 : vector<1x128xf32> to vector<2x128xf32>
    %6 = arith.addf %3, %5 : vector<2x128xf32>
    %7 = tpu.iota {dimensions = array<i32: 1>} : vector<1x32xi32>
    %c10_i32 = arith.constant 10 : i32
    %8 = vector.broadcast %c10_i32 : i32 to vector<1x32xi32>
    %9 = arith.cmpi slt, %7, %8 : vector<1x32xi32>
    %10 = vector.extract_strided_slice %6 {offsets = [0, 0], sizes = [2, 32], strides = [1, 1]} : vector<2x128xf32> to vector<2x32xf32>
    %11 = vector.extract_strided_slice %10 {offsets = [0, 10], sizes = [2, 1], strides = [1, 1]} : vector<2x32xf32> to vector<2x1xf32>
    %cst_5 = arith.constant 0.000000e+00 : f32
    %12 = vector.broadcast %cst_5 : f32 to vector<2x1xf32>
    %13 = arith.maximumf %11, %12 : vector<2x1xf32>
    %cst_6 = arith.constant -1.000000e+30 : f32
    %14 = vector.shape_cast %9 : vector<1x32xi1> to vector<1x32xi1>
    %15 = vector.broadcast %14 : vector<1x32xi1> to vector<2x32xi1>
    %16 = vector.broadcast %cst_6 : f32 to vector<2x32xf32>
    %17 = arith.select %15, %10, %16 : vector<2x32xi1>, vector<2x32xf32>
    %cst_7 = arith.constant dense<0xFF800000> : vector<2xf32>
    %18 = vector.multi_reduction <maximumf>, %17, %cst_7 [1] : vector<2x32xf32> to vector<2xf32>
    %19 = vector.shape_cast %18 : vector<2xf32> to vector<2x1xf32>
    %20 = vector.broadcast %19 : vector<2x1xf32> to vector<2x32xf32>
    %21 = arith.subf %17, %20 : vector<2x32xf32>
    %22 = math.exp %21 : vector<2x32xf32>
    %cst_8 = arith.constant dense<0.000000e+00> : vector<2xf32>
    %23 = vector.multi_reduction <add>, %22, %cst_8 [1] : vector<2x32xf32> to vector<2xf32>
    %24 = vector.shape_cast %23 : vector<2xf32> to vector<2x1xf32>
    %25 = math.log %24 : vector<2x1xf32>
    %26 = arith.addf %19, %25 : vector<2x1xf32>
    %c0_9 = arith.constant 0 : index
    %c0_10 = arith.constant 0 : index
    %27 = memref.load %arg4[%c0_9, %c0_10] : memref<1x4xf32, #tpu.memory_space<smem>>
    %28 = vector.broadcast %27 : f32 to vector<2x1xf32>
    %29 = arith.subf %28, %13 : vector<2x1xf32>
    %30 = vector.broadcast %26 : vector<2x1xf32> to vector<2x32xf32>
    %31 = arith.subf %17, %30 : vector<2x32xf32>
    %32 = vector.broadcast %29 : vector<2x1xf32> to vector<2x32xf32>
    %33 = arith.addf %32, %31 : vector<2x32xf32>
    %34 = vector.extract_strided_slice %6 {offsets = [0, 32], sizes = [2, 32], strides = [1, 1]} : vector<2x128xf32> to vector<2x32xf32>
    %35 = vector.extract_strided_slice %34 {offsets = [0, 10], sizes = [2, 1], strides = [1, 1]} : vector<2x32xf32> to vector<2x1xf32>
    %cst_11 = arith.constant 0.000000e+00 : f32
    %36 = vector.broadcast %cst_11 : f32 to vector<2x1xf32>
    %37 = arith.maximumf %35, %36 : vector<2x1xf32>
    %cst_12 = arith.constant -1.000000e+30 : f32
    %38 = vector.shape_cast %9 : vector<1x32xi1> to vector<1x32xi1>
    %39 = vector.broadcast %38 : vector<1x32xi1> to vector<2x32xi1>
    %40 = vector.broadcast %cst_12 : f32 to vector<2x32xf32>
    %41 = arith.select %39, %34, %40 : vector<2x32xi1>, vector<2x32xf32>
    %cst_13 = arith.constant dense<0xFF800000> : vector<2xf32>
    %42 = vector.multi_reduction <maximumf>, %41, %cst_13 [1] : vector<2x32xf32> to vector<2xf32>
    %43 = vector.shape_cast %42 : vector<2xf32> to vector<2x1xf32>
    %44 = vector.broadcast %43 : vector<2x1xf32> to vector<2x32xf32>
    %45 = arith.subf %41, %44 : vector<2x32xf32>
    %46 = math.exp %45 : vector<2x32xf32>
    %cst_14 = arith.constant dense<0.000000e+00> : vector<2xf32>
    %47 = vector.multi_reduction <add>, %46, %cst_14 [1] : vector<2x32xf32> to vector<2xf32>
    %48 = vector.shape_cast %47 : vector<2xf32> to vector<2x1xf32>
    %49 = math.log %48 : vector<2x1xf32>
    %50 = arith.addf %43, %49 : vector<2x1xf32>
    %c0_15 = arith.constant 0 : index
    %c1 = arith.constant 1 : index
    %51 = memref.load %arg4[%c0_15, %c1] : memref<1x4xf32, #tpu.memory_space<smem>>
    %52 = vector.broadcast %51 : f32 to vector<2x1xf32>
    %53 = arith.subf %52, %37 : vector<2x1xf32>
    %54 = vector.broadcast %50 : vector<2x1xf32> to vector<2x32xf32>
    %55 = arith.subf %41, %54 : vector<2x32xf32>
    %56 = vector.broadcast %53 : vector<2x1xf32> to vector<2x32xf32>
    %57 = arith.addf %56, %55 : vector<2x32xf32>
    %58 = vector.extract_strided_slice %6 {offsets = [0, 64], sizes = [2, 32], strides = [1, 1]} : vector<2x128xf32> to vector<2x32xf32>
    %59 = vector.extract_strided_slice %58 {offsets = [0, 10], sizes = [2, 1], strides = [1, 1]} : vector<2x32xf32> to vector<2x1xf32>
    %cst_16 = arith.constant 0.000000e+00 : f32
    %60 = vector.broadcast %cst_16 : f32 to vector<2x1xf32>
    %61 = arith.maximumf %59, %60 : vector<2x1xf32>
    %cst_17 = arith.constant -1.000000e+30 : f32
    %62 = vector.shape_cast %9 : vector<1x32xi1> to vector<1x32xi1>
    %63 = vector.broadcast %62 : vector<1x32xi1> to vector<2x32xi1>
    %64 = vector.broadcast %cst_17 : f32 to vector<2x32xf32>
    %65 = arith.select %63, %58, %64 : vector<2x32xi1>, vector<2x32xf32>
    %cst_18 = arith.constant dense<0xFF800000> : vector<2xf32>
    %66 = vector.multi_reduction <maximumf>, %65, %cst_18 [1] : vector<2x32xf32> to vector<2xf32>
    %67 = vector.shape_cast %66 : vector<2xf32> to vector<2x1xf32>
    %68 = vector.broadcast %67 : vector<2x1xf32> to vector<2x32xf32>
    %69 = arith.subf %65, %68 : vector<2x32xf32>
    %70 = math.exp %69 : vector<2x32xf32>
    %cst_19 = arith.constant dense<0.000000e+00> : vector<2xf32>
    %71 = vector.multi_reduction <add>, %70, %cst_19 [1] : vector<2x32xf32> to vector<2xf32>
    %72 = vector.shape_cast %71 : vector<2xf32> to vector<2x1xf32>
    %73 = math.log %72 : vector<2x1xf32>
    %74 = arith.addf %67, %73 : vector<2x1xf32>
    %c0_20 = arith.constant 0 : index
    %c2 = arith.constant 2 : index
    %75 = memref.load %arg4[%c0_20, %c2] : memref<1x4xf32, #tpu.memory_space<smem>>
    %76 = vector.broadcast %75 : f32 to vector<2x1xf32>
    %77 = arith.subf %76, %61 : vector<2x1xf32>
    %78 = vector.broadcast %74 : vector<2x1xf32> to vector<2x32xf32>
    %79 = arith.subf %65, %78 : vector<2x32xf32>
    %80 = vector.broadcast %77 : vector<2x1xf32> to vector<2x32xf32>
    %81 = arith.addf %80, %79 : vector<2x32xf32>
    %82 = vector.extract_strided_slice %6 {offsets = [0, 96], sizes = [2, 32], strides = [1, 1]} : vector<2x128xf32> to vector<2x32xf32>
    %83 = vector.extract_strided_slice %82 {offsets = [0, 10], sizes = [2, 1], strides = [1, 1]} : vector<2x32xf32> to vector<2x1xf32>
    %cst_21 = arith.constant 0.000000e+00 : f32
    %84 = vector.broadcast %cst_21 : f32 to vector<2x1xf32>
    %85 = arith.maximumf %83, %84 : vector<2x1xf32>
    %cst_22 = arith.constant -1.000000e+30 : f32
    %86 = vector.shape_cast %9 : vector<1x32xi1> to vector<1x32xi1>
    %87 = vector.broadcast %86 : vector<1x32xi1> to vector<2x32xi1>
    %88 = vector.broadcast %cst_22 : f32 to vector<2x32xf32>
    %89 = arith.select %87, %82, %88 : vector<2x32xi1>, vector<2x32xf32>
    %cst_23 = arith.constant dense<0xFF800000> : vector<2xf32>
    %90 = vector.multi_reduction <maximumf>, %89, %cst_23 [1] : vector<2x32xf32> to vector<2xf32>
    %91 = vector.shape_cast %90 : vector<2xf32> to vector<2x1xf32>
    %92 = vector.broadcast %91 : vector<2x1xf32> to vector<2x32xf32>
    %93 = arith.subf %89, %92 : vector<2x32xf32>
    %94 = math.exp %93 : vector<2x32xf32>
    %cst_24 = arith.constant dense<0.000000e+00> : vector<2xf32>
    %95 = vector.multi_reduction <add>, %94, %cst_24 [1] : vector<2x32xf32> to vector<2xf32>
    %96 = vector.shape_cast %95 : vector<2xf32> to vector<2x1xf32>
    %97 = math.log %96 : vector<2x1xf32>
    %98 = arith.addf %91, %97 : vector<2x1xf32>
    %c0_25 = arith.constant 0 : index
    %c3 = arith.constant 3 : index
    %99 = memref.load %arg4[%c0_25, %c3] : memref<1x4xf32, #tpu.memory_space<smem>>
    %100 = vector.broadcast %99 : f32 to vector<2x1xf32>
    %101 = arith.subf %100, %85 : vector<2x1xf32>
    %102 = vector.broadcast %98 : vector<2x1xf32> to vector<2x32xf32>
    %103 = arith.subf %89, %102 : vector<2x32xf32>
    %104 = vector.broadcast %101 : vector<2x1xf32> to vector<2x32xf32>
    %105 = arith.addf %104, %103 : vector<2x32xf32>
    %106 = arith.maximumf %33, %57 : vector<2x32xf32>
    %107 = arith.maximumf %106, %81 : vector<2x32xf32>
    %108 = arith.maximumf %107, %105 : vector<2x32xf32>
    %cst_26 = arith.constant 0.000000e+00 : f32
    %109 = vector.broadcast %cst_26 : f32 to vector<2x32xf32>
    %110 = arith.subf %33, %108 : vector<2x32xf32>
    %111 = math.exp %110 : vector<2x32xf32>
    %112 = arith.addf %109, %111 : vector<2x32xf32>
    %113 = arith.subf %57, %108 : vector<2x32xf32>
    %114 = math.exp %113 : vector<2x32xf32>
    %115 = arith.addf %112, %114 : vector<2x32xf32>
    %116 = arith.subf %81, %108 : vector<2x32xf32>
    %117 = math.exp %116 : vector<2x32xf32>
    %118 = arith.addf %115, %117 : vector<2x32xf32>
    %119 = arith.subf %105, %108 : vector<2x32xf32>
    %120 = math.exp %119 : vector<2x32xf32>
    %121 = arith.addf %118, %120 : vector<2x32xf32>
    %122 = math.log %121 : vector<2x32xf32>
    %123 = arith.addf %108, %122 : vector<2x32xf32>
    %c0_27 = arith.constant 0 : index
    %c0_28 = arith.constant 0 : index
    %124 = vector.load %arg5[%c0_27, %c0_28] : memref<2x32xf32, #tpu.memory_space<vmem>>, vector<2x32xf32>
    tpu.vector_store %arg5[%c0_27, %c0_28], %123 {strides = array<i32>} : memref<2x32xf32, #tpu.memory_space<vmem>>, vector<2x32xf32>,
    return
  }
  func.func @transform_0(%arg0: i32) -> (i32, i32) {
    %c0_i32 = arith.constant 0 : i32
    %c0_i32_0 = arith.constant 0 : i32
    return %arg0, %c0_i32 : i32, i32
  }
  func.func @transform_1(%arg0: i32) -> (i32, i32) {
    %c0_i32 = arith.constant 0 : i32
    %c0_i32_0 = arith.constant 0 : i32
    %c0_i32_1 = arith.constant 0 : i32
    return %c0_i32, %c0_i32_0 : i32, i32
  }
  func.func @transform_2(%arg0: i32) -> (i32, i32) {
    %c0_i32 = arith.constant 0 : i32
    %c0_i32_0 = arith.constant 0 : i32
    %c0_i32_1 = arith.constant 0 : i32
    return %c0_i32, %c0_i32_0 : i32, i32
  }
  func.func @transform_3(%arg0: i32) -> (i32, i32) {
    %c0_i32 = arith.constant 0 : i32
    %c0_i32_0 = arith.constant 0 : i32
    %c0_i32_1 = arith.constant 0 : i32
    return %c0_i32, %c0_i32_0 : i32, i32
  }
  func.func @transform_4(%arg0: i32) -> (i32, i32) {
    %c0_i32 = arith.constant 0 : i32
    %c0_i32_0 = arith.constant 0 : i32
    return %arg0, %c0_i32 : i32, i32
  }
}

</mosaic_0001>

<llo_original>
// kernel: tpu_custom_call.1
$region0: #{tpu_custom_call.1}
  #allocation0 [shape = 'u32[]', space=smem, size = 0x4, offset = 0x4, fixed_abs, tag = 'smem constant byte address 0x4 - core index']
  #allocation1 [shape = 'u32[144,128]{1,0:T(1,128)}', space=vmem, size = 0x12000, scoped, tag = 'internal scratch']
  %s0 = inlined_call_operand.hbm [shape: f32[2,1024], index: 0, kind: input, shape index: {}]
  %s1 = inlined_call_operand.hbm [shape: bf16[1024,128], index: 1, kind: input, shape index: {}]
  %s2 = inlined_call_operand.vmem [shape: f32[1,128], index: 2, kind: input, shape index: {}]
  %s3 = inlined_call_operand.vmem [shape: f32[1,4], index: 3, kind: input, shape index: {}]
  %s4 = inlined_call_operand.hbm [shape: f32[2,32], index: 4, kind: output, shape index: {}]
  %s5 = sld [smem:[#allocation0]]
  $region38: #{tpu_custom_call.1} parent=0
    _
  %s7 = ssub.s32 1, %s5
  %s8 = scalar_select 0, %s7, %s5
  $region1: #{tpu_custom_call.1} parent=0
    #allocation2 [shape = 'u8[8192]{0}', space=vmem, size = 0x2000, scoped, tag = 'input window, operand 0, single buffered']
    #allocation3 [shape = 's32[1]{0}', space=sflag, size = 0x4, scoped, tag = 'scoped memory for tpu_custom_call.1']
    #allocation4 [shape = 's32[1]{0}', space=sflag, size = 0x4, scoped, tag = 'scoped memory for tpu_custom_call.1']
    #allocation5 [shape = 's32[1]{0}', space=sflag, size = 0x4, scoped, tag = 'scoped memory for tpu_custom_call.1']
    #allocation6 [shape = 'u8[262144]{0}', space=vmem, size = 0x40000, scoped, tag = 'input window, operand 1, single buffered']
    #allocation7 [shape = 's32[1]{0}', space=sflag, size = 0x4, scoped, tag = 'scoped memory for tpu_custom_call.1']
    #allocation8 [shape = 'u8[512]{0}', space=smem, size = 0x200, scoped, tag = 'input window, operand 3, single buffered']
    #allocation9 [shape = 'u8[1024]{0}', space=vmem, size = 0x400, scoped, tag = 'output window, operand 0, single buffered']
    %9 = vsyncpa [#allocation3], 0
    %10 = vsyncpa [#allocation7], 0
    %11 = vsyncpa [#allocation5], 0
    %12 = vsyncpa [#allocation4], 0
    // Predicated region
    $region2: #{tpu_custom_call.1} parent=1 // pred_check
      _
    $region3: #{tpu_custom_call.1} parent=1 // pred_check_branch
      %14 = sbr.rel (0) target = $region5
    $region4: #{tpu_custom_call.1} parent=1 // pred_region
      %s16 = ssub.s32 256, 256
      %17 = vsyncadd [#allocation3], %s16
      %s19 = sshll.u32 [#allocation2], 4
      %s20 = int_to_ptr.vmem [resolvable:$true] %s19
      %22 = dma.hbm_to_vmem [thread:$0]  %s0, 256, %s20, [#allocation3]
    $region5: #{tpu_custom_call.1} parent=1 // pred_fallthru
      _
    // Predicated region
    $region6: #{tpu_custom_call.1} parent=1 // pred_check
      _
    $region7: #{tpu_custom_call.1} parent=1 // pred_check_branch
      %24 = sbr.rel (0) target = $region9
    $region8: #{tpu_custom_call.1} parent=1 // pred_region
      %s26 = ssub.s32 8192, 8192
      %27 = vsyncadd [#allocation7], %s26
      %s28 = sshll.u32 [#allocation6], 4
      %s29 = int_to_ptr.vmem [resolvable:$true] %s28
      %34 = dma.hbm_to_vmem [thread:$0]  %s1, 8192, %s29, [#allocation7], 64, 64, 4
    $region9: #{tpu_custom_call.1} parent=1 // pred_fallthru
      _
    // Predicated region
    $region10: #{tpu_custom_call.1} parent=1 // pred_check
      _
    $region11: #{tpu_custom_call.1} parent=1 // pred_check_branch
      %36 = sbr.rel (0) target = $region13
    $region12: #{tpu_custom_call.1} parent=1 // pred_region
      _
    $region13: #{tpu_custom_call.1} parent=1 // pred_fallthru
      _
    // Predicated region
    $region14: #{tpu_custom_call.1} parent=1 // pred_check
      _
    $region15: #{tpu_custom_call.1} parent=1 // pred_check_branch
      %38 = sbr.rel (0) target = $region17
    $region16: #{tpu_custom_call.1} parent=1 // pred_region
      %s40 = ssub.s32 16, 16
      %41 = vsyncadd [#allocation5], %s40
      %s43 = sshll.u32 %s3, 4
      %s44 = int_to_ptr.vmem [resolvable:$true] %s43
      %46 = dma.vmem_to_smem %s44, 16, [#allocation8], [#allocation5]
    $region17: #{tpu_custom_call.1} parent=1 // pred_fallthru
      _
    // Predicated region
    $region18: #{tpu_custom_call.1} parent=1 // pred_check
      _
    $region19: #{tpu_custom_call.1} parent=1 // pred_check_branch
      %48 = sbr.rel (0) target = $region21
    $region20: #{tpu_custom_call.1} parent=1 // pred_region
      %49 = dma.done [#allocation3], 256
    $region21: #{tpu_custom_call.1} parent=1 // pred_fallthru
      _
    // Predicated region
    $region22: #{tpu_custom_call.1} parent=1 // pred_check
      _
    $region23: #{tpu_custom_call.1} parent=1 // pred_check_branch
      %51 = sbr.rel (0) target = $region25
    $region24: #{tpu_custom_call.1} parent=1 // pred_region
      %52 = dma.done [#allocation7], 8192
    $region25: #{tpu_custom_call.1} parent=1 // pred_fallthru
      _
    // Predicated region
    $region26: #{tpu_custom_call.1} parent=1 // pred_check
      _
    $region27: #{tpu_custom_call.1} parent=1 // pred_check_branch
      %54 = sbr.rel (0) target = $region29
    $region28: #{tpu_custom_call.1} parent=1 // pred_region
      %55 = dma.done [#allocation5], 16
    $region29: #{tpu_custom_call.1} parent=1 // pred_fallthru
      _
    %56 = sfence
    %v58 = vld [vmem:[#allocation2] sm:$0xff]
    %v59 = vld [vmem:[#allocation2 + $0x8] sm:$0xff]
    %v62 = vcombine.high %v58, %v58
    %v64 = vunpack.c.l.s4 1983009808
    %v65 = vunpack.c.0.s8 %v64
    %v66 = vlaneseq
    %v67 = vshrl.u32 %v66, 7
    %v68 = vsub.s32 %v65, %v67
    %v69 = vrot.slane %v58, %v68
    %v71 = vunpack.c.l.s4 1983009808
    %v72 = vunpack.c.0.s8 %v71
    %v73 = vlaneseq
    %v74 = vshrl.u32 %v73, 7
    %v75 = vsub.s32 %v72, %v74
    %v76 = vrot.slane %v62, %v75
    %v77 = vcombine.high %v69, %v69
    %v78 = vcombine.high %v76, %v76
    %v79 = vcombine.high %v59, %v59
    %v81 = vunpack.c.l.s4 1983009808
    %v82 = vunpack.c.0.s8 %v81
    %v83 = vlaneseq
    %v84 = vshrl.u32 %v83, 7
    %v85 = vsub.s32 %v82, %v84
    %v86 = vrot.slane %v59, %v85
    %v88 = vunpack.c.l.s4 1983009808
    %v89 = vunpack.c.0.s8 %v88
    %v90 = vlaneseq
    %v91 = vshrl.u32 %v90, 7
    %v92 = vsub.s32 %v89, %v91
    %v93 = vrot.slane %v79, %v92
    %v94 = vcombine.high %v86, %v86
    %v95 = vcombine.high %v93, %v93
    %v104 = vpack.c.bf16 %v69, %v69
    %v105 = vpack.c.bf16 %v77, %v77
    %v106 = vpack.c.bf16 %v76, %v76
    %v107 = vpack.c.bf16 %v78, %v78
    %v108 = vpack.c.bf16 %v86, %v86
    %v109 = vpack.c.bf16 %v94, %v94
    %v110 = vpack.c.bf16 %v93, %v93
    %v111 = vpack.c.bf16 %v95, %v95
    %v112 = vld [vmem:[#allocation6] sm:$0xf]
    %v113 = vld [vmem:[#allocation6 + $0x4] sm:$0xf]
    %v114 = vld [vmem:[#allocation6 + $0x8] sm:$0xf]
    %v115 = vld [vmem:[#allocation6 + $0xc] sm:$0xf]
    %v116 = vld [vmem:[#allocation6 + $0x10] sm:$0xf]
    %v117 = vld [vmem:[#allocation6 + $0x14] sm:$0xf]
    %v118 = vld [vmem:[#allocation6 + $0x18] sm:$0xf]
    %v119 = vld [vmem:[#allocation6 + $0x1c] sm:$0xf]
    %v120 = vld [vmem:[#allocation6 + $0x20] sm:$0xf]
    %v121 = vld [vmem:[#allocation6 + $0x24] sm:$0xf]
    %v122 = vld [vmem:[#allocation6 + $0x28] sm:$0xf]
    %v123 = vld [vmem:[#allocation6 + $0x2c] sm:$0xf]
    %v124 = vld [vmem:[#allocation6 + $0x30] sm:$0xf]
    %v125 = vld [vmem:[#allocation6 + $0x34] sm:$0xf]
    %v126 = vld [vmem:[#allocation6 + $0x38] sm:$0xf]
    %v127 = vld [vmem:[#allocation6 + $0x3c] sm:$0xf]
    %v128 = vld [vmem:[#allocation6 + $0x40] sm:$0xf]
    %v129 = vld [vmem:[#allocation6 + $0x44] sm:$0xf]
    %v130 = vld [vmem:[#allocation6 + $0x48] sm:$0xf]
    %v131 = vld [vmem:[#allocation6 + $0x4c] sm:$0xf]
    %v132 = vld [vmem:[#allocation6 + $0x50] sm:$0xf]
    %v133 = vld [vmem:[#allocation6 + $0x54] sm:$0xf]
    %v134 = vld [vmem:[#allocation6 + $0x58] sm:$0xf]
    %v135 = vld [vmem:[#allocation6 + $0x5c] sm:$0xf]
    %v136 = vld [vmem:[#allocation6 + $0x60] sm:$0xf]
    %v137 = vld [vmem:[#allocation6 + $0x64] sm:$0xf]
    %v138 = vld [vmem:[#allocation6 + $0x68] sm:$0xf]
    %v139 = vld [vmem:[#allocation6 + $0x6c] sm:$0xf]
    %v140 = vld [vmem:[#allocation6 + $0x70] sm:$0xf]
    %v141 = vld [vmem:[#allocation6 + $0x74] sm:$0xf]
    %v142 = vld [vmem:[#allocation6 + $0x78] sm:$0xf]
    %v143 = vld [vmem:[#allocation6 + $0x7c] sm:$0xf]
    %v144 = vld [vmem:[#allocation6 + $0x80] sm:$0xf]
    %v145 = vld [vmem:[#allocation6 + $0x84] sm:$0xf]
    %v146 = vld [vmem:[#allocation6 + $0x88] sm:$0xf]
    %v147 = vld [vmem:[#allocation6 + $0x8c] sm:$0xf]
    %v148 = vld [vmem:[#allocation6 + $0x90] sm:$0xf]
    %v149 = vld [vmem:[#allocation6 + $0x94] sm:$0xf]
    %v150 = vld [vmem:[#allocation6 + $0x98] sm:$0xf]
    %v151 = vld [vmem:[#allocation6 + $0x9c] sm:$0xf]
    %v152 = vld [vmem:[#allocation6 + $0xa0] sm:$0xf]
    %v153 = vld [vmem:[#allocation6 + $0xa4] sm:$0xf]
    %v154 = vld [vmem:[#allocation6 + $0xa8] sm:$0xf]
    %v155 = vld [vmem:[#allocation6 + $0xac] sm:$0xf]
    %v156 = vld [vmem:[#allocation6 + $0xb0] sm:$0xf]
    %v157 = vld [vmem:[#allocation6 + $0xb4] sm:$0xf]
    %v158 = vld [vmem:[#allocation6 + $0xb8] sm:$0xf]
    %v159 = vld [vmem:[#allocation6 + $0xbc] sm:$0xf]
    %v160 = vld [vmem:[#allocation6 + $0xc0] sm:$0xf]
    %v161 = vld [vmem:[#allocation6 + $0xc4] sm:$0xf]
    %v162 = vld [vmem:[#allocation6 + $0xc8] sm:$0xf]
    %v163 = vld [vmem:[#allocation6 + $0xcc] sm:$0xf]
    %v164 = vld [vmem:[#allocation6 + $0xd0] sm:$0xf]
    %v165 = vld [vmem:[#allocation6 + $0xd4] sm:$0xf]
    %v166 = vld [vmem:[#allocation6 + $0xd8] sm:$0xf]
    %v167 = vld [vmem:[#allocation6 + $0xdc] sm:$0xf]
    %v168 = vld [vmem:[#allocation6 + $0xe0] sm:$0xf]
    %v169 = vld [vmem:[#allocation6 + $0xe4] sm:$0xf]
    %v170 = vld [vmem:[#allocation6 + $0xe8] sm:$0xf]
    %v171 = vld [vmem:[#allocation6 + $0xec] sm:$0xf]
    %v172 = vld [vmem:[#allocation6 + $0xf0] sm:$0xf]
    %v173 = vld [vmem:[#allocation6 + $0xf4] sm:$0xf]
    %v174 = vld [vmem:[#allocation6 + $0xf8] sm:$0xf]
    %v175 = vld [vmem:[#allocation6 + $0xfc] sm:$0xf]
    %v176 = vld [vmem:[#allocation6 + $0x100] sm:$0xf]
    %v177 = vld [vmem:[#allocation6 + $0x104] sm:$0xf]
    %v178 = vld [vmem:[#allocation6 + $0x108] sm:$0xf]
    %v179 = vld [vmem:[#allocation6 + $0x10c] sm:$0xf]
    %v180 = vld [vmem:[#allocation6 + $0x110] sm:$0xf]
    %v181 = vld [vmem:[#allocation6 + $0x114] sm:$0xf]
    %v182 = vld [vmem:[#allocation6 + $0x118] sm:$0xf]
    %v183 = vld [vmem:[#allocation6 + $0x11c] sm:$0xf]
    %v184 = vld [vmem:[#allocation6 + $0x120] sm:$0xf]
    %v185 = vld [vmem:[#allocation6 + $0x124] sm:$0xf]
    %v186 = vld [vmem:[#allocation6 + $0x128] sm:$0xf]
    %v187 = vld [vmem:[#allocation6 + $0x12c] sm:$0xf]
    %v188 = vld [vmem:[#allocation6 + $0x130] sm:$0xf]
    %v189 = vld [vmem:[#allocation6 + $0x134] sm:$0xf]
    %v190 = vld [vmem:[#allocation6 + $0x138] sm:$0xf]
    %v191 = vld [vmem:[#allocation6 + $0x13c] sm:$0xf]
    %v192 = vld [vmem:[#allocation6 + $0x140] sm:$0xf]
    %v193 = vld [vmem:[#allocation6 + $0x144] sm:$0xf]
    %v194 = vld [vmem:[#allocation6 + $0x148] sm:$0xf]
    %v195 = vld [vmem:[#allocation6 + $0x14c] sm:$0xf]
    %v196 = vld [vmem:[#allocation6 + $0x150] sm:$0xf]
    %v197 = vld [vmem:[#allocation6 + $0x154] sm:$0xf]
    %v198 = vld [vmem:[#allocation6 + $0x158] sm:$0xf]
    %v199 = vld [vmem:[#allocation6 + $0x15c] sm:$0xf]
    %v200 = vld [vmem:[#allocation6 + $0x160] sm:$0xf]
    %v201 = vld [vmem:[#allocation6 + $0x164] sm:$0xf]
    %v202 = vld [vmem:[#allocation6 + $0x168] sm:$0xf]
    %v203 = vld [vmem:[#allocation6 + $0x16c] sm:$0xf]
    %v204 = vld [vmem:[#allocation6 + $0x170] sm:$0xf]
    %v205 = vld [vmem:[#allocation6 + $0x174] sm:$0xf]
    %v206 = vld [vmem:[#allocation6 + $0x178] sm:$0xf]
    %v207 = vld [vmem:[#allocation6 + $0x17c] sm:$0xf]
    %v208 = vld [vmem:[#allocation6 + $0x180] sm:$0xf]
    %v209 = vld [vmem:[#allocation6 + $0x184] sm:$0xf]
    %v210 = vld [vmem:[#allocation6 + $0x188] sm:$0xf]
    %v211 = vld [vmem:[#allocation6 + $0x18c] sm:$0xf]
    %v212 = vld [vmem:[#allocation6 + $0x190] sm:$0xf]
    %v213 = vld [vmem:[#allocation6 + $0x194] sm:$0xf]
    %v214 = vld [vmem:[#allocation6 + $0x198] sm:$0xf]
    %v215 = vld [vmem:[#allocation6 + $0x19c] sm:$0xf]
    %v216 = vld [vmem:[#allocation6 + $0x1a0] sm:$0xf]
    %v217 = vld [vmem:[#allocation6 + $0x1a4] sm:$0xf]
    %v218 = vld [vmem:[#allocation6 + $0x1a8] sm:$0xf]
    %v219 = vld [vmem:[#allocation6 + $0x1ac] sm:$0xf]
    %v220 = vld [vmem:[#allocation6 + $0x1b0] sm:$0xf]
    %v221 = vld [vmem:[#allocation6 + $0x1b4] sm:$0xf]
    %v222 = vld [vmem:[#allocation6 + $0x1b8] sm:$0xf]
    %v223 = vld [vmem:[#allocation6 + $0x1bc] sm:$0xf]
    %v224 = vld [vmem:[#allocation6 + $0x1c0] sm:$0xf]
    %v225 = vld [vmem:[#allocation6 + $0x1c4] sm:$0xf]
    %v226 = vld [vmem:[#allocation6 + $0x1c8] sm:$0xf]
    %v227 = vld [vmem:[#allocation6 + $0x1cc] sm:$0xf]
    %v228 = vld [vmem:[#allocation6 + $0x1d0] sm:$0xf]
    %v229 = vld [vmem:[#allocation6 + $0x1d4] sm:$0xf]
    %v230 = vld [vmem:[#allocation6 + $0x1d8] sm:$0xf]
    %v231 = vld [vmem:[#allocation6 + $0x1dc] sm:$0xf]
    %v232 = vld [vmem:[#allocation6 + $0x1e0] sm:$0xf]
    %v233 = vld [vmem:[#allocation6 + $0x1e4] sm:$0xf]
    %v234 = vld [vmem:[#allocation6 + $0x1e8] sm:$0xf]
    %v235 = vld [vmem:[#allocation6 + $0x1ec] sm:$0xf]
    %v236 = vld [vmem:[#allocation6 + $0x1f0] sm:$0xf]
    %v237 = vld [vmem:[#allocation6 + $0x1f4] sm:$0xf]
    %v238 = vld [vmem:[#allocation6 + $0x1f8] sm:$0xf]
    %v239 = vld [vmem:[#allocation6 + $0x1fc] sm:$0xf]
    %v240 = vld [vmem:[%s2] sm:$0x1]
    %v242 = vlaneseq
    %v243 = vshrl.u32 %v242, 7
    %v244 = vsub.s32 0, %v243
    %v245 = vrot.slane %v240, %v244
    %v375 = vunpack.c.l.b16 %v112
    %v376 = vunpack.c.l.b16 %v113
    %v377 = vunpack.c.l.b16 %v114
    %v378 = vunpack.c.l.b16 %v115
    %v379 = vunpack.c.l.b16 %v116
    %v380 = vunpack.c.l.b16 %v117
    %v381 = vunpack.c.l.b16 %v118
    %v382 = vunpack.c.l.b16 %v119
    %v383 = vunpack.c.l.b16 %v120
    %v384 = vunpack.c.l.b16 %v121
    %v385 = vunpack.c.l.b16 %v122
    %v386 = vunpack.c.l.b16 %v123
    %v387 = vunpack.c.l.b16 %v124
    %v388 = vunpack.c.l.b16 %v125
    %v389 = vunpack.c.l.b16 %v126
    %v390 = vunpack.c.l.b16 %v127
    %v391 = vunpack.c.l.b16 %v128
    %v392 = vunpack.c.l.b16 %v129
    %v393 = vunpack.c.l.b16 %v130
    %v394 = vunpack.c.l.b16 %v131
    %v395 = vunpack.c.l.b16 %v132
    %v396 = vunpack.c.l.b16 %v133
    %v397 = vunpack.c.l.b16 %v134
    %v398 = vunpack.c.l.b16 %v135
    %v399 = vunpack.c.l.b16 %v136
    %v400 = vunpack.c.l.b16 %v137
    %v401 = vunpack.c.l.b16 %v138
    %v402 = vunpack.c.l.b16 %v139
    %v403 = vunpack.c.l.b16 %v140
    %v404 = vunpack.c.l.b16 %v141
    %v405 = vunpack.c.l.b16 %v142
    %v406 = vunpack.c.l.b16 %v143
    %v407 = vunpack.c.l.b16 %v144
    %v408 = vunpack.c.l.b16 %v145
    %v409 = vunpack.c.l.b16 %v146
    %v410 = vunpack.c.l.b16 %v147
    %v411 = vunpack.c.l.b16 %v148
    %v412 = vunpack.c.l.b16 %v149
    %v413 = vunpack.c.l.b16 %v150
    %v414 = vunpack.c.l.b16 %v151
    %v415 = vunpack.c.l.b16 %v152
    %v416 = vunpack.c.l.b16 %v153
    %v417 = vunpack.c.l.b16 %v154
    %v418 = vunpack.c.l.b16 %v155
    %v419 = vunpack.c.l.b16 %v156
    %v420 = vunpack.c.l.b16 %v157
    %v421 = vunpack.c.l.b16 %v158
    %v422 = vunpack.c.l.b16 %v159
    %v423 = vunpack.c.l.b16 %v160
    %v424 = vunpack.c.l.b16 %v161
    %v425 = vunpack.c.l.b16 %v162
    %v426 = vunpack.c.l.b16 %v163
    %v427 = vunpack.c.l.b16 %v164
    %v428 = vunpack.c.l.b16 %v165
    %v429 = vunpack.c.l.b16 %v166
    %v430 = vunpack.c.l.b16 %v167
    %v431 = vunpack.c.l.b16 %v168
    %v432 = vunpack.c.l.b16 %v169
    %v433 = vunpack.c.l.b16 %v170
    %v434 = vunpack.c.l.b16 %v171
    %v435 = vunpack.c.l.b16 %v172
    %v436 = vunpack.c.l.b16 %v173
    %v437 = vunpack.c.l.b16 %v174
    %v438 = vunpack.c.l.b16 %v175
    %v439 = vunpack.c.l.b16 %v176
    %v440 = vunpack.c.l.b16 %v177
    %v441 = vunpack.c.l.b16 %v178
    %v442 = vunpack.c.l.b16 %v179
    %v443 = vunpack.c.l.b16 %v180
    %v444 = vunpack.c.l.b16 %v181
    %v445 = vunpack.c.l.b16 %v182
    %v446 = vunpack.c.l.b16 %v183
    %v447 = vunpack.c.l.b16 %v184
    %v448 = vunpack.c.l.b16 %v185
    %v449 = vunpack.c.l.b16 %v186
    %v450 = vunpack.c.l.b16 %v187
    %v451 = vunpack.c.l.b16 %v188
    %v452 = vunpack.c.l.b16 %v189
    %v453 = vunpack.c.l.b16 %v190
    %v454 = vunpack.c.l.b16 %v191
    %v455 = vunpack.c.l.b16 %v192
    %v456 = vunpack.c.l.b16 %v193
    %v457 = vunpack.c.l.b16 %v194
    %v458 = vunpack.c.l.b16 %v195
    %v459 = vunpack.c.l.b16 %v196
    %v460 = vunpack.c.l.b16 %v197
    %v461 = vunpack.c.l.b16 %v198
    %v462 = vunpack.c.l.b16 %v199
    %v463 = vunpack.c.l.b16 %v200
    %v464 = vunpack.c.l.b16 %v201
    %v465 = vunpack.c.l.b16 %v202
    %v466 = vunpack.c.l.b16 %v203
    %v467 = vunpack.c.l.b16 %v204
    %v468 = vunpack.c.l.b16 %v205
    %v469 = vunpack.c.l.b16 %v206
    %v470 = vunpack.c.l.b16 %v207
    %v471 = vunpack.c.l.b16 %v208
    %v472 = vunpack.c.l.b16 %v209
    %v473 = vunpack.c.l.b16 %v210
    %v474 = vunpack.c.l.b16 %v211
    %v475 = vunpack.c.l.b16 %v212
    %v476 = vunpack.c.l.b16 %v213
    %v477 = vunpack.c.l.b16 %v214
    %v478 = vunpack.c.l.b16 %v215
    %v479 = vunpack.c.l.b16 %v216
    %v480 = vunpack.c.l.b16 %v217
    %v481 = vunpack.c.l.b16 %v218
    %v482 = vunpack.c.l.b16 %v219
    %v483 = vunpack.c.l.b16 %v220
    %v484 = vunpack.c.l.b16 %v221
    %v485 = vunpack.c.l.b16 %v222
    %v486 = vunpack.c.l.b16 %v223
    %v487 = vunpack.c.l.b16 %v224
    %v488 = vunpack.c.l.b16 %v225
    %v489 = vunpack.c.l.b16 %v226
    %v490 = vunpack.c.l.b16 %v227
    %v491 = vunpack.c.l.b16 %v228
    %v492 = vunpack.c.l.b16 %v229
    %v493 = vunpack.c.l.b16 %v230
    %v494 = vunpack.c.l.b16 %v231
    %v495 = vunpack.c.l.b16 %v232
    %v496 = vunpack.c.l.b16 %v233
    %v497 = vunpack.c.l.b16 %v234
    %v498 = vunpack.c.l.b16 %v235
    %v499 = vunpack.c.l.b16 %v236
    %v500 = vunpack.c.l.b16 %v237
    %v501 = vunpack.c.l.b16 %v238
    %v502 = vunpack.c.l.b16 %v239
    %v503 = vpack.c.b16 %v376, %v375
    %v504 = vpack.c.b16 %v378, %v377
    %v505 = vpack.c.b16 %v380, %v379
    %v506 = vpack.c.b16 %v382, %v381
    %v507 = vpack.c.b16 %v384, %v383
    %v508 = vpack.c.b16 %v386, %v385
    %v509 = vpack.c.b16 %v388, %v387
    %v510 = vpack.c.b16 %v390, %v389
    %v511 = vpack.c.b16 %v392, %v391
    %v512 = vpack.c.b16 %v394, %v393
    %v513 = vpack.c.b16 %v396, %v395
    %v514 = vpack.c.b16 %v398, %v397
    %v515 = vpack.c.b16 %v400, %v399
    %v516 = vpack.c.b16 %v402, %v401
    %v517 = vpack.c.b16 %v404, %v403
    %v518 = vpack.c.b16 %v406, %v405
    %v519 = vpack.c.b16 %v408, %v407
    %v520 = vpack.c.b16 %v410, %v409
    %v521 = vpack.c.b16 %v412, %v411
    %v522 = vpack.c.b16 %v414, %v413
    %v523 = vpack.c.b16 %v416, %v415
    %v524 = vpack.c.b16 %v418, %v417
    %v525 = vpack.c.b16 %v420, %v419
    %v526 = vpack.c.b16 %v422, %v421
    %v527 = vpack.c.b16 %v424, %v423
    %v528 = vpack.c.b16 %v426, %v425
    %v529 = vpack.c.b16 %v428, %v427
    %v530 = vpack.c.b16 %v430, %v429
    %v531 = vpack.c.b16 %v432, %v431
    %v532 = vpack.c.b16 %v434, %v433
    %v533 = vpack.c.b16 %v436, %v435
    %v534 = vpack.c.b16 %v438, %v437
    %v535 = vpack.c.b16 %v440, %v439
    %v536 = vpack.c.b16 %v442, %v441
    %v537 = vpack.c.b16 %v444, %v443
    %v538 = vpack.c.b16 %v446, %v445
    %v539 = vpack.c.b16 %v448, %v447
    %v540 = vpack.c.b16 %v450, %v449
    %v541 = vpack.c.b16 %v452, %v451
    %v542 = vpack.c.b16 %v454, %v453
    %v543 = vpack.c.b16 %v456, %v455
    %v544 = vpack.c.b16 %v458, %v457
    %v545 = vpack.c.b16 %v460, %v459
    %v546 = vpack.c.b16 %v462, %v461
    %v547 = vpack.c.b16 %v464, %v463
    %v548 = vpack.c.b16 %v466, %v465
    %v549 = vpack.c.b16 %v468, %v467
    %v550 = vpack.c.b16 %v470, %v469
    %v551 = vpack.c.b16 %v472, %v471
    %v552 = vpack.c.b16 %v474, %v473
    %v553 = vpack.c.b16 %v476, %v475
    %v554 = vpack.c.b16 %v478, %v477
    %v555 = vpack.c.b16 %v480, %v479
    %v556 = vpack.c.b16 %v482, %v481
    %v557 = vpack.c.b16 %v484, %v483
    %v558 = vpack.c.b16 %v486, %v485
    %v559 = vpack.c.b16 %v488, %v487
    %v560 = vpack.c.b16 %v490, %v489
    %v561 = vpack.c.b16 %v492, %v491
    %v562 = vpack.c.b16 %v494, %v493
    %v563 = vpack.c.b16 %v496, %v495
    %v564 = vpack.c.b16 %v498, %v497
    %v565 = vpack.c.b16 %v500, %v499
    %v566 = vpack.c.b16 %v502, %v501
    %631 = vmatprep.subr.bf16.mxu0 0
    %632 = vmatpush1.bf16.msra.mxu0 %v510
    %633 = vmatprep.subr.bf16.mxu0 0
    %634 = vmatpush1.bf16.msra.mxu0 %v509
    %635 = vmatprep.subr.bf16.mxu0 0
    %636 = vmatpush1.bf16.msra.mxu0 %v508
    %637 = vmatprep.subr.bf16.mxu0 0
    %638 = vmatpush1.bf16.msra.mxu0 %v507
    %639 = vmatprep.subr.bf16.mxu0 0
    %640 = vmatpush1.bf16.msra.mxu0 %v506
    %641 = vmatprep.subr.bf16.mxu0 0
    %642 = vmatpush1.bf16.msra.mxu0 %v505
    %643 = vmatprep.subr.bf16.mxu0 0
    %644 = vmatpush1.bf16.msra.mxu0 %v504
    %645 = vmatprep.subr.bf16.mxu0 0
    %646 = vmatpush1.bf16.msra.mxu0 %v503
    %647 = vmatprep.subr.bf16.mxu0 0
    %648 = vmatpush2.bf16.msra.mxu0 %v518
    %649 = vmatprep.subr.bf16.mxu0 0
    %650 = vmatpush2.bf16.msra.mxu0 %v517
    %651 = vmatprep.subr.bf16.mxu0 0
    %652 = vmatpush2.bf16.msra.mxu0 %v516
    %653 = vmatprep.subr.bf16.mxu0 0
    %654 = vmatpush2.bf16.msra.mxu0 %v515
    %655 = vmatprep.subr.bf16.mxu0 0
    %656 = vmatpush2.bf16.msra.mxu0 %v514
    %657 = vmatprep.subr.bf16.mxu0 0
    %658 = vmatpush2.bf16.msra.mxu0 %v513
    %659 = vmatprep.subr.bf16.mxu0 0
    %660 = vmatpush2.bf16.msra.mxu0 %v512
    %661 = vmatprep.subr.bf16.mxu0 0
    %662 = vmatpush2.bf16.msra.mxu0 %v511
    %663 = vmatprep.mubr.bf16.mxu0 %v105
    %664 = vmatmul.mubr.bf16.gmra.mxu0 %v104
    %v665 = vpop.f32.mrf.mxu0
    %v666 = vadd.f32 %v245, %v665
    %v667 = vpop.f32.mrf.mxu0
    %v668 = vpop.f32.mrf.mxu0
    %v669 = vpop.f32.mrf.mxu0
    %670 = vdwg.mxu0
    %671 = vmatprep.subr.bf16.mxu0 0
    %672 = vmatpush1.bf16.msra.mxu0 %v526
    %673 = vmatprep.subr.bf16.mxu0 0
    %674 = vmatpush1.bf16.msra.mxu0 %v525
    %675 = vmatprep.subr.bf16.mxu0 0
    %676 = vmatpush1.bf16.msra.mxu0 %v524
    %677 = vmatprep.subr.bf16.mxu0 0
    %678 = vmatpush1.bf16.msra.mxu0 %v523
    %679 = vmatprep.subr.bf16.mxu0 0
    %680 = vmatpush1.bf16.msra.mxu0 %v522
    %681 = vmatprep.subr.bf16.mxu0 0
    %682 = vmatpush1.bf16.msra.mxu0 %v521
    %683 = vmatprep.subr.bf16.mxu0 0
    %684 = vmatpush1.bf16.msra.mxu0 %v520
    %685 = vmatprep.subr.bf16.mxu0 0
    %686 = vmatpush1.bf16.msra.mxu0 %v519
    %687 = vmatprep.subr.bf16.mxu0 0
    %688 = vmatpush2.bf16.msra.mxu0 %v534
    %689 = vmatprep.subr.bf16.mxu0 0
    %690 = vmatpush2.bf16.msra.mxu0 %v533
    %691 = vmatprep.subr.bf16.mxu0 0
    %692 = vmatpush2.bf16.msra.mxu0 %v532
    %693 = vmatprep.subr.bf16.mxu0 0
    %694 = vmatpush2.bf16.msra.mxu0 %v531
    %695 = vmatprep.subr.bf16.mxu0 0
    %696 = vmatpush2.bf16.msra.mxu0 %v530
    %697 = vmatprep.subr.bf16.mxu0 0
    %698 = vmatpush2.bf16.msra.mxu0 %v529
    %699 = vmatprep.subr.bf16.mxu0 0
    %700 = vmatpush2.bf16.msra.mxu0 %v528
    %701 = vmatprep.subr.bf16.mxu0 0
    %702 = vmatpush2.bf16.msra.mxu0 %v527
    %703 = vmatprep.mubr.bf16.mxu0 %v107
    %704 = vmatmul.mubr.bf16.gmra.mxu0 %v106
    %v705 = vpop.f32.mrf.mxu0
    %v706 = vadd.f32 %v666, %v705
    %v707 = vpop.f32.mrf.mxu0
    %v708 = vpop.f32.mrf.mxu0
    %v709 = vpop.f32.mrf.mxu0
    %710 = vdwg.mxu0
    %711 = vmatprep.subr.bf16.mxu0 0
    %712 = vmatpush1.bf16.msra.mxu0 %v542
    %713 = vmatprep.subr.bf16.mxu0 0
    %714 = vmatpush1.bf16.msra.mxu0 %v541
    %715 = vmatprep.subr.bf16.mxu0 0
    %716 = vmatpush1.bf16.msra.mxu0 %v540
    %717 = vmatprep.subr.bf16.mxu0 0
    %718 = vmatpush1.bf16.msra.mxu0 %v539
    %719 = vmatprep.subr.bf16.mxu0 0
    %720 = vmatpush1.bf16.msra.mxu0 %v538
    %721 = vmatprep.subr.bf16.mxu0 0
    %722 = vmatpush1.bf16.msra.mxu0 %v537
    %723 = vmatprep.subr.bf16.mxu0 0
    %724 = vmatpush1.bf16.msra.mxu0 %v536
    %725 = vmatprep.subr.bf16.mxu0 0
    %726 = vmatpush1.bf16.msra.mxu0 %v535
    %727 = vmatprep.subr.bf16.mxu0 0
    %728 = vmatpush2.bf16.msra.mxu0 %v550
    %729 = vmatprep.subr.bf16.mxu0 0
    %730 = vmatpush2.bf16.msra.mxu0 %v549
    %731 = vmatprep.subr.bf16.mxu0 0
    %732 = vmatpush2.bf16.msra.mxu0 %v548
    %733 = vmatprep.subr.bf16.mxu0 0
    %734 = vmatpush2.bf16.msra.mxu0 %v547
    %735 = vmatprep.subr.bf16.mxu0 0
    %736 = vmatpush2.bf16.msra.mxu0 %v546
    %737 = vmatprep.subr.bf16.mxu0 0
    %738 = vmatpush2.bf16.msra.mxu0 %v545
    %739 = vmatprep.subr.bf16.mxu0 0
    %740 = vmatpush2.bf16.msra.mxu0 %v544
    %741 = vmatprep.subr.bf16.mxu0 0
    %742 = vmatpush2.bf16.msra.mxu0 %v543
    %743 = vmatprep.mubr.bf16.mxu0 %v109
    %744 = vmatmul.mubr.bf16.gmra.mxu0 %v108
    %v745 = vpop.f32.mrf.mxu0
    %v746 = vadd.f32 %v706, %v745
    %v747 = vpop.f32.mrf.mxu0
    %v748 = vpop.f32.mrf.mxu0
    %v749 = vpop.f32.mrf.mxu0
    %750 = vdwg.mxu0
    %751 = vmatprep.subr.bf16.mxu0 0
    %752 = vmatpush1.bf16.msra.mxu0 %v558
    %753 = vmatprep.subr.bf16.mxu0 0
    %754 = vmatpush1.bf16.msra.mxu0 %v557
    %755 = vmatprep.subr.bf16.mxu0 0
    %756 = vmatpush1.bf16.msra.mxu0 %v556
    %757 = vmatprep.subr.bf16.mxu0 0
    %758 = vmatpush1.bf16.msra.mxu0 %v555
    %759 = vmatprep.subr.bf16.mxu0 0
    %760 = vmatpush1.bf16.msra.mxu0 %v554
    %761 = vmatprep.subr.bf16.mxu0 0
    %762 = vmatpush1.bf16.msra.mxu0 %v553
    %763 = vmatprep.subr.bf16.mxu0 0
    %764 = vmatpush1.bf16.msra.mxu0 %v552
    %765 = vmatprep.subr.bf16.mxu0 0
    %766 = vmatpush1.bf16.msra.mxu0 %v551
    %767 = vmatprep.subr.bf16.mxu0 0
    %768 = vmatpush2.bf16.msra.mxu0 %v566
    %769 = vmatprep.subr.bf16.mxu0 0
    %770 = vmatpush2.bf16.msra.mxu0 %v565
    %771 = vmatprep.subr.bf16.mxu0 0
    %772 = vmatpush2.bf16.msra.mxu0 %v564
    %773 = vmatprep.subr.bf16.mxu0 0
    %774 = vmatpush2.bf16.msra.mxu0 %v563
    %775 = vmatprep.subr.bf16.mxu0 0
    %776 = vmatpush2.bf16.msra.mxu0 %v562
    %777 = vmatprep.subr.bf16.mxu0 0
    %778 = vmatpush2.bf16.msra.mxu0 %v561
    %779 = vmatprep.subr.bf16.mxu0 0
    %780 = vmatpush2.bf16.msra.mxu0 %v560
    %781 = vmatprep.subr.bf16.mxu0 0
    %782 = vmatpush2.bf16.msra.mxu0 %v559
    %783 = vmatprep.mubr.bf16.mxu0 %v111
    %784 = vmatmul.mubr.bf16.gmra.mxu0 %v110
    %v785 = vpop.f32.mrf.mxu0
    %v786 = vadd.f32 %v746, %v785
    %v787 = vpop.f32.mrf.mxu0
    %v788 = vpop.f32.mrf.mxu0
    %v789 = vpop.f32.mrf.mxu0
    %790 = vdwg.mxu0
    %v791 = vlaneseq
    %v792 = vand.u32 %v791, 127
    %vm793 = vcmp.lt.s32.totalorder %v792, 10
    %v794 = vmax.f32 %v786, 0.0
    %v795 = vsel %vm793, 1, 0
    %vm796 = vcmp.eq.s32.totalorder %v795, 1
    %v797 = vsel %vm796, %v786, -1e+30
    %vm798 = vcmask 254976
    %v799 = vsel %vm798, %v797, -inf
    %800 = vmax.xlane.f32.xlu0 %v799
    %v801 = vpop.xlane.xlu0 %800
    %v802 = vsub.f32 %v797, %v801
    %v803 = vmul.f32 %v802, 1.442695
    %v804 = vpow.pop %v803
    %v805 = vsel %vm798, %v804, 0.0
    %806 = vadd.xlane.f32.xlu0 %v805
    %v807 = vpop.xlane.xlu0 %806
    %v808 = vlog2.pop %v807
    %v809 = vmul.f32 %v808, 0.6931472
    %v810 = vadd.f32 %v801, %v809
    %s811 = sld [smem:[#allocation8]]
    %v812 = vstv %s811
    %v813 = vsub.f32 %v812, %v794
    %v814 = vsub.f32 %v797, %v810
    %816 = vset.pattern.permute.xlu0 10
    %817 = vperm.xlu0 %816, %v813
    %v818 = vpop.permute.xlu0 %817
    %v820 = vadd.f32 %v818, %v814
    %822 = vrot.lane.b32.xlu0 %v786, 96
    %v823 = vpop.permute.xlu0 %822
    %v825 = vsel %vm796, %v823, -1e+30
    %v826 = vsel %vm798, %v825, -inf
    %827 = vmax.xlane.f32.xlu0 %v826
    %v828 = vpop.xlane.xlu0 %827
    %v829 = vsub.f32 %v825, %v828
    %v830 = vmul.f32 %v829, 1.442695
    %v831 = vpow.pop %v830
    %v832 = vsel %vm798, %v831, 0.0
    %833 = vadd.xlane.f32.xlu0 %v832
    %v834 = vpop.xlane.xlu0 %833
    %v835 = vlog2.pop %v834
    %v836 = vmul.f32 %v835, 0.6931472
    %v837 = vadd.f32 %v828, %v836
    %s838 = sld [smem:[#allocation8 + $0x1]]
    %v839 = vstv %s838
    %v840 = vsub.f32 %v839, %v794
    %v841 = vsub.f32 %v825, %v837
    %843 = vset.pattern.permute.xlu0 42
    %844 = vperm.xlu0 %843, %v840
    %v845 = vpop.permute.xlu0 %844
    %v847 = vadd.f32 %v845, %v841
    %848 = vrot.lane.b32.xlu0 %v786, 64
    %v849 = vpop.permute.xlu0 %848
    %v851 = vsel %vm796, %v849, -1e+30
    %v852 = vsel %vm798, %v851, -inf
    %853 = vmax.xlane.f32.xlu0 %v852
    %v854 = vpop.xlane.xlu0 %853
    %v855 = vsub.f32 %v851, %v854
    %v856 = vmul.f32 %v855, 1.442695
    %v857 = vpow.pop %v856
    %v858 = vsel %vm798, %v857, 0.0
    %859 = vadd.xlane.f32.xlu0 %v858
    %v860 = vpop.xlane.xlu0 %859
    %v861 = vlog2.pop %v860
    %v862 = vmul.f32 %v861, 0.6931472
    %v863 = vadd.f32 %v854, %v862
    %s864 = sld [smem:[#allocation8 + $0x2]]
    %v865 = vstv %s864
    %v866 = vsub.f32 %v865, %v794
    %v867 = vsub.f32 %v851, %v863
    %869 = vset.pattern.permute.xlu0 74
    %870 = vperm.xlu0 %869, %v866
    %v871 = vpop.permute.xlu0 %870
    %v873 = vadd.f32 %v871, %v867
    %874 = vrot.lane.b32.xlu0 %v786, 32
    %v875 = vpop.permute.xlu0 %874
    %v877 = vsel %vm796, %v875, -1e+30
    %v878 = vsel %vm798, %v877, -inf
    %879 = vmax.xlane.f32.xlu0 %v878
    %v880 = vpop.xlane.xlu0 %879
    %v881 = vsub.f32 %v877, %v880
    %v882 = vmul.f32 %v881, 1.442695
    %v883 = vpow.pop %v882
    %v884 = vsel %vm798, %v883, 0.0
    %885 = vadd.xlane.f32.xlu0 %v884
    %v886 = vpop.xlane.xlu0 %885
    %v887 = vlog2.pop %v886
    %v888 = vmul.f32 %v887, 0.6931472
    %v889 = vadd.f32 %v880, %v888
    %s890 = sld [smem:[#allocation8 + $0x3]]
    %v891 = vstv %s890
    %v892 = vsub.f32 %v891, %v794
    %v893 = vsub.f32 %v877, %v889
    %895 = vset.pattern.permute.xlu0 106
    %896 = vperm.xlu0 %895, %v892
    %v897 = vpop.permute.xlu0 %896
    %v899 = vadd.f32 %v897, %v893
    %v900 = vmax.f32 %v820, %v847
    %v901 = vmax.f32 %v900, %v873
    %v902 = vmax.f32 %v901, %v899
    %v903 = vsub.f32 %v820, %v902
    %v904 = vmul.f32 %v903, 1.442695
    %v905 = vpow.pop %v904
    %v906 = vadd.f32 %v905, 0.0
    %v907 = vsub.f32 %v847, %v902
    %v908 = vmul.f32 %v907, 1.442695
    %v909 = vpow.pop %v908
    %v910 = vadd.f32 %v906, %v909
    %v911 = vsub.f32 %v873, %v902
    %v912 = vmul.f32 %v911, 1.442695
    %v913 = vpow.pop %v912
    %v914 = vadd.f32 %v910, %v913
    %v915 = vsub.f32 %v899, %v902
    %v916 = vmul.f32 %v915, 1.442695
    %v917 = vpow.pop %v916
    %v918 = vadd.f32 %v914, %v917
    %v919 = vlog2.pop %v918
    %v920 = vmul.f32 %v919, 0.6931472
    %v921 = vadd.f32 %v902, %v920
    %922 = vst.msk [vmem:[#allocation9] sm:$0x3] %vm798, %v921
    // Predicated region
    $region30: #{tpu_custom_call.1} parent=1 // pred_check
      _
    $region31: #{tpu_custom_call.1} parent=1 // pred_check_branch
      %924 = sbr.rel (0) target = $region33
    $region32: #{tpu_custom_call.1} parent=1 // pred_region
      %s926 = ssub.s32 32, 32
      %927 = vsyncadd [#allocation4], %s926
      %s929 = sshll.u32 [#allocation9], 4
      %s930 = int_to_ptr.vmem [resolvable:$true] %s929
      %932 = dma.vmem_to_hbm [thread:$0]  %s930, 32, %s4, [#allocation4]
    $region33: #{tpu_custom_call.1} parent=1 // pred_fallthru
      _
    // Predicated region
    $region34: #{tpu_custom_call.1} parent=1 // pred_check
      _
    $region35: #{tpu_custom_call.1} parent=1 // pred_check_branch
      %934 = sbr.rel (0) target = $region37
    $region36: #{tpu_custom_call.1} parent=1 // pred_region
      %935 = dma.done [#allocation4], 32
    $region37: #{tpu_custom_call.1} parent=1 // pred_fallthru
      _
    %936 = vsyncpa [#allocation3], 1
    %937 = vsyncpa [#allocation7], 1
    %938 = vsyncpa [#allocation4], 1
    %939 = vsyncpa [#allocation5], 1

</llo_original>
